<compile_context>
chip_gen: v7x
topology: tpu7x:2x2x1
jax: 0.10.0
libtpu: 0.0.40
codegen_flags: <defaults>
</compile_context>

<pallas_src>
import functools

import jax
import jax.numpy as jnp
from jax.experimental import pallas as pl
from jax.experimental.pallas import tpu as pltpu

STD = 0.05
_LANES = 512            # last-dim width: large multiple of 128 -> unmasked stores
_MAX_BLOCK_ROWS = 256   # (256, 512) f32 tile = 512 KiB per buffer


def _round_up(n, m):
    return ((n + m - 1) // m) * m


def _i32const(v):
    """uint32 hex constant reinterpreted as int32 (two's complement)."""
    v &= 0xFFFFFFFF
    if v >= 1 << 31:
        v -= 1 << 32
    return jnp.int32(v)


def _hash_u24(idx, seed, salt):
    """Counter-based hash -> 24 uniform bits in [0, 2^24). int32 math only.

    splitmix/murmur3-fmix style finalizer; arithmetic shifts + masks emulate
    logical shifts so everything stays in plain 32-bit signless ops.
    """
    h = idx * _i32const(0x9E3779B1)
    h = h + seed * _i32const(0x85EBCA77) + _i32const(salt)
    h = h ^ ((h >> 16) & 0xFFFF)
    h = h * _i32const(0x85EBCA6B)
    h = h ^ ((h >> 13) & 0x7FFFF)
    h = h * _i32const(0xC2B2AE35)
    h = h ^ ((h >> 16) & 0xFFFF)
    return (h >> 8) & 0xFFFFFF


def _sincos_2pi(u):
    """cos(2*pi*u), sin(2*pi*u) for u in [0, 1).

    Quadrant reduction + short Taylor polynomials on [0, pi/2]; avoids relying
    on trig lowerings in Mosaic (only mul/add/floor/where are used).
    """
    v = 4.0 * u
    q = jnp.floor(v)                    # quadrant 0..3
    phi = (0.5 * jnp.pi) * (v - q)      # [0, pi/2)
    p2 = phi * phi
    c0 = 1.0 + p2 * (-0.5 + p2 * (1.0 / 24.0 + p2 * (-1.0 / 720.0 + p2 * (1.0 / 40320.0))))
    s0 = phi * (1.0 + p2 * (-1.0 / 6.0 + p2 * (1.0 / 120.0
                + p2 * (-1.0 / 5040.0 + p2 * (1.0 / 362880.0)))))
    q1 = q == 1.0
    q2 = q == 2.0
    q3 = q == 3.0
    cos_t = jnp.where(q1, -s0, jnp.where(q2, -c0, jnp.where(q3, s0, c0)))
    sin_t = jnp.where(q1, c0, jnp.where(q2, -s0, jnp.where(q3, -c0, s0)))
    return cos_t, sin_t


def gaussian_noise_kernel(seed_ref, x_ref, o_ref, *, std):
    tm, lanes = x_ref.shape
    half = tm // 2                      # static; tm is a multiple of 16
    seed = seed_ref[0]

    # Globally-unique counter per Box-Muller pair (unique across grid steps,
    # so each tile draws independent noise regardless of core assignment).
    base = pl.program_id(0) * (half * lanes)
    row = jax.lax.broadcasted_iota(jnp.int32, (half, lanes), 0)
    col = jax.lax.broadcasted_iota(jnp.int32, (half, lanes), 1)
    idx = base + row * lanes + col

    inv24 = jnp.float32(1.0 / 16777216.0)
    u1 = (_hash_u24(idx, seed, 0x68BC21EB).astype(jnp.float32) + 1.0) * inv24  # (0, 1]
    u2 = _hash_u24(idx, seed, 0x02E5BE93).astype(jnp.float32) * inv24          # [0, 1)

    # Box-Muller; BOTH outputs are used (one per half of the tile).
    r = jnp.sqrt(-2.0 * jnp.log(u1))
    cos_t, sin_t = _sincos_2pi(u2)
    stdf = jnp.float32(std)
    n0 = stdf * (r * cos_t)
    n1 = stdf * (r * sin_t)

    x = x_ref[...].astype(jnp.float32)
    o_ref[0:half, :] = (x[0:half, :] + n0).astype(o_ref.dtype)
    o_ref[half:, :] = (x[half:, :] + n1).astype(o_ref.dtype)


def gaussian_noise(x, seed: int, std: float = STD):
    """y = x + N(0, std^2), same shape/dtype as x (GaussianNoise.forward)."""
    orig_shape = x.shape
    total = x.size

    rows = -(-total // _LANES)
    if rows <= _MAX_BLOCK_ROWS:
        tm = _round_up(max(rows, 1), 16)   # keep both halves sublane-aligned
    else:
        tm = _MAX_BLOCK_ROWS
    rows_padded = _round_up(rows, tm)
    padded_total = rows_padded * _LANES

    # Lane-dense 2-D slab (last dim = 512, a large multiple of 128).
    xf = x.reshape(-1)
    if padded_total != total:
        xf = jnp.pad(xf, (0, padded_total - total))
    x2 = xf.reshape(rows_padded, _LANES)
    seed_arr = jnp.asarray([seed], dtype=jnp.int32)

    # Note: input_output_aliases intentionally omitted -- x2 may be a reshape
    # view of the caller's array, so donating it could clobber caller state.
    out2 = pl.pallas_call(
        functools.partial(gaussian_noise_kernel, std=float(std)),
        out_shape=jax.ShapeDtypeStruct((rows_padded, _LANES), x.dtype),
        grid=(rows_padded // tm,),
        in_specs=[
            pl.BlockSpec(memory_space=pltpu.MemorySpace.SMEM),    # seed scalar
            pl.BlockSpec((tm, _LANES), lambda i: (i, 0)),         # x tile
        ],
        out_specs=pl.BlockSpec((tm, _LANES), lambda i: (i, 0)),
        compiler_params=pltpu.CompilerParams(
            dimension_semantics=("parallel",),
            vmem_limit_bytes=32 * 1024 * 1024,
        ),
    )(seed_arr, x2)

    return out2.reshape(-1)[:total].reshape(orig_shape)


if __name__ == "__main__":
    key = jax.random.PRNGKey(0)
    # NCHW like the PyTorch module: batch=2, channels=4, spatial 16x16.
    x = jax.random.normal(key, (2, 4, 16, 16), dtype=jnp.float32)

    y = gaussian_noise(x, seed=0, std=STD)
    jax.block_until_ready(y)

    assert y.shape == x.shape and y.dtype == x.dtype
    diff = y - x
    max_abs = float(jnp.max(jnp.abs(diff)))
    assert 0.0 < max_abs < 1.0, max_abs
    # Added noise should look like N(0, 0.05^2).
    d_std = float(jnp.std(diff))
    d_mean = float(jnp.mean(diff))
    assert 0.03 < d_std < 0.07, d_std
    assert abs(d_mean) < 0.01, d_mean

    print("KERNEL_OK")
</pallas_src>

<mosaic_0001>
module attributes {stable_mosaic.version = 11 : i64} {
  func.func @gaussian_noise_kernel(%arg0: i32, %arg1: memref<1xi32, #tpu.memory_space<smem>>, %arg2: memref<16x512xf32, #tpu.memory_space<vmem>>, %arg3: memref<16x512xf32, #tpu.memory_space<vmem>>) attributes {dimension_semantics = [#tpu.dimension_semantics<parallel>], iteration_bounds = array<i64: 1>, scalar_prefetch = 0 : i64, scratch_operands = 0 : i64, tpu.core_type = #tpu.core_type<tc>, window_params = [{transform_indices = @transform_0, window_bounds = array<i64: 1>}, {transform_indices = @transform_1, window_bounds = array<i64: 16, 512>}, {transform_indices = @transform_2, window_bounds = array<i64: 16, 512>}]} {
    %c0 = arith.constant 0 : index
    %0 = memref.load %arg1[%c0] : memref<1xi32, #tpu.memory_space<smem>>
    %c4096_i32 = arith.constant 4096 : i32
    %1 = arith.muli %arg0, %c4096_i32 : i32
    %2 = tpu.iota {dimensions = array<i32: 0>} : vector<8x512xi32>
    %3 = tpu.iota {dimensions = array<i32: 1>} : vector<8x512xi32>
    %c512_i32 = arith.constant 512 : i32
    %4 = vector.broadcast %c512_i32 : i32 to vector<8x512xi32>
    %5 = arith.muli %2, %4 : vector<8x512xi32>
    %6 = vector.broadcast %1 : i32 to vector<8x512xi32>
    %7 = arith.addi %6, %5 : vector<8x512xi32>
    %8 = arith.addi %7, %3 : vector<8x512xi32>
    %c-1640531535_i32 = arith.constant -1640531535 : i32
    %9 = vector.broadcast %c-1640531535_i32 : i32 to vector<8x512xi32>
    %10 = arith.muli %8, %9 : vector<8x512xi32>
    %c-2048144777_i32 = arith.constant -2048144777 : i32
    %11 = arith.muli %0, %c-2048144777_i32 : i32
    %12 = vector.broadcast %11 : i32 to vector<8x512xi32>
    %13 = arith.addi %10, %12 : vector<8x512xi32>
    %c1757159915_i32 = arith.constant 1757159915 : i32
    %14 = vector.broadcast %c1757159915_i32 : i32 to vector<8x512xi32>
    %15 = arith.addi %13, %14 : vector<8x512xi32>
    %c16_i32 = arith.constant 16 : i32
    %16 = vector.broadcast %c16_i32 : i32 to vector<8x512xi32>
    %17 = arith.shrsi %15, %16 : vector<8x512xi32>
    %c65535_i32 = arith.constant 65535 : i32
    %18 = vector.broadcast %c65535_i32 : i32 to vector<8x512xi32>
    %19 = arith.andi %17, %18 : vector<8x512xi32>
    %20 = arith.xori %15, %19 : vector<8x512xi32>
    %c-2048144789_i32 = arith.constant -2048144789 : i32
    %21 = vector.broadcast %c-2048144789_i32 : i32 to vector<8x512xi32>
    %22 = arith.muli %20, %21 : vector<8x512xi32>
    %c13_i32 = arith.constant 13 : i32
    %23 = vector.broadcast %c13_i32 : i32 to vector<8x512xi32>
    %24 = arith.shrsi %22, %23 : vector<8x512xi32>
    %c524287_i32 = arith.constant 524287 : i32
    %25 = vector.broadcast %c524287_i32 : i32 to vector<8x512xi32>
    %26 = arith.andi %24, %25 : vector<8x512xi32>
    %27 = arith.xori %22, %26 : vector<8x512xi32>
    %c-1028477387_i32 = arith.constant -1028477387 : i32
    %28 = vector.broadcast %c-1028477387_i32 : i32 to vector<8x512xi32>
    %29 = arith.muli %27, %28 : vector<8x512xi32>
    %c16_i32_0 = arith.constant 16 : i32
    %30 = vector.broadcast %c16_i32_0 : i32 to vector<8x512xi32>
    %31 = arith.shrsi %29, %30 : vector<8x512xi32>
    %c65535_i32_1 = arith.constant 65535 : i32
    %32 = vector.broadcast %c65535_i32_1 : i32 to vector<8x512xi32>
    %33 = arith.andi %31, %32 : vector<8x512xi32>
    %34 = arith.xori %29, %33 : vector<8x512xi32>
    %c8_i32 = arith.constant 8 : i32
    %35 = vector.broadcast %c8_i32 : i32 to vector<8x512xi32>
    %36 = arith.shrsi %34, %35 : vector<8x512xi32>
    %c16777215_i32 = arith.constant 16777215 : i32
    %37 = vector.broadcast %c16777215_i32 : i32 to vector<8x512xi32>
    %38 = arith.andi %36, %37 : vector<8x512xi32>
    %39 = arith.sitofp %38 : vector<8x512xi32> to vector<8x512xf32>
    %cst = arith.constant 1.000000e+00 : f32
    %40 = vector.broadcast %cst : f32 to vector<8x512xf32>
    %41 = arith.addf %39, %40 : vector<8x512xf32>
    %cst_2 = arith.constant 5.96046448E-8 : f32
    %42 = vector.broadcast %cst_2 : f32 to vector<8x512xf32>
    %43 = arith.mulf %41, %42 : vector<8x512xf32>
    %c-1640531535_i32_3 = arith.constant -1640531535 : i32
    %44 = vector.broadcast %c-1640531535_i32_3 : i32 to vector<8x512xi32>
    %45 = arith.muli %8, %44 : vector<8x512xi32>
    %c-2048144777_i32_4 = arith.constant -2048144777 : i32
    %46 = arith.muli %0, %c-2048144777_i32_4 : i32
    %47 = vector.broadcast %46 : i32 to vector<8x512xi32>
    %48 = arith.addi %45, %47 : vector<8x512xi32>
    %c48610963_i32 = arith.constant 48610963 : i32
    %49 = vector.broadcast %c48610963_i32 : i32 to vector<8x512xi32>
    %50 = arith.addi %48, %49 : vector<8x512xi32>
    %c16_i32_5 = arith.constant 16 : i32
    %51 = vector.broadcast %c16_i32_5 : i32 to vector<8x512xi32>
    %52 = arith.shrsi %50, %51 : vector<8x512xi32>
    %c65535_i32_6 = arith.constant 65535 : i32
    %53 = vector.broadcast %c65535_i32_6 : i32 to vector<8x512xi32>
    %54 = arith.andi %52, %53 : vector<8x512xi32>
    %55 = arith.xori %50, %54 : vector<8x512xi32>
    %c-2048144789_i32_7 = arith.constant -2048144789 : i32
    %56 = vector.broadcast %c-2048144789_i32_7 : i32 to vector<8x512xi32>
    %57 = arith.muli %55, %56 : vector<8x512xi32>
    %c13_i32_8 = arith.constant 13 : i32
    %58 = vector.broadcast %c13_i32_8 : i32 to vector<8x512xi32>
    %59 = arith.shrsi %57, %58 : vector<8x512xi32>
    %c524287_i32_9 = arith.constant 524287 : i32
    %60 = vector.broadcast %c524287_i32_9 : i32 to vector<8x512xi32>
    %61 = arith.andi %59, %60 : vector<8x512xi32>
    %62 = arith.xori %57, %61 : vector<8x512xi32>
    %c-1028477387_i32_10 = arith.constant -1028477387 : i32
    %63 = vector.broadcast %c-1028477387_i32_10 : i32 to vector<8x512xi32>
    %64 = arith.muli %62, %63 : vector<8x512xi32>
    %c16_i32_11 = arith.constant 16 : i32
    %65 = vector.broadcast %c16_i32_11 : i32 to vector<8x512xi32>
    %66 = arith.shrsi %64, %65 : vector<8x512xi32>
    %c65535_i32_12 = arith.constant 65535 : i32
    %67 = vector.broadcast %c65535_i32_12 : i32 to vector<8x512xi32>
    %68 = arith.andi %66, %67 : vector<8x512xi32>
    %69 = arith.xori %64, %68 : vector<8x512xi32>
    %c8_i32_13 = arith.constant 8 : i32
    %70 = vector.broadcast %c8_i32_13 : i32 to vector<8x512xi32>
    %71 = arith.shrsi %69, %70 : vector<8x512xi32>
    %c16777215_i32_14 = arith.constant 16777215 : i32
    %72 = vector.broadcast %c16777215_i32_14 : i32 to vector<8x512xi32>
    %73 = arith.andi %71, %72 : vector<8x512xi32>
    %74 = arith.sitofp %73 : vector<8x512xi32> to vector<8x512xf32>
    %cst_15 = arith.constant 5.96046448E-8 : f32
    %75 = vector.broadcast %cst_15 : f32 to vector<8x512xf32>
    %76 = arith.mulf %74, %75 : vector<8x512xf32>
    %77 = math.log %43 : vector<8x512xf32>
    %cst_16 = arith.constant -2.000000e+00 : f32
    %78 = vector.broadcast %cst_16 : f32 to vector<8x512xf32>
    %79 = arith.mulf %78, %77 : vector<8x512xf32>
    %80 = math.sqrt %79 : vector<8x512xf32>
    %cst_17 = arith.constant 4.000000e+00 : f32
    %81 = vector.broadcast %cst_17 : f32 to vector<8x512xf32>
    %82 = arith.mulf %81, %76 : vector<8x512xf32>
    %83 = math.floor %82 : vector<8x512xf32>
    %84 = arith.subf %82, %83 : vector<8x512xf32>
    %cst_18 = arith.constant 1.57079637 : f32
    %85 = vector.broadcast %cst_18 : f32 to vector<8x512xf32>
    %86 = arith.mulf %85, %84 : vector<8x512xf32>
    %87 = arith.mulf %86, %86 : vector<8x512xf32>
    %cst_19 = arith.constant 2.48015876E-5 : f32
    %88 = vector.broadcast %cst_19 : f32 to vector<8x512xf32>
    %89 = arith.mulf %87, %88 : vector<8x512xf32>
    %cst_20 = arith.constant -0.00138888892 : f32
    %90 = vector.broadcast %cst_20 : f32 to vector<8x512xf32>
    %91 = arith.addf %90, %89 : vector<8x512xf32>
    %92 = arith.mulf %87, %91 : vector<8x512xf32>
    %cst_21 = arith.constant 0.0416666679 : f32
    %93 = vector.broadcast %cst_21 : f32 to vector<8x512xf32>
    %94 = arith.addf %93, %92 : vector<8x512xf32>
    %95 = arith.mulf %87, %94 : vector<8x512xf32>
    %cst_22 = arith.constant -5.000000e-01 : f32
    %96 = vector.broadcast %cst_22 : f32 to vector<8x512xf32>
    %97 = arith.addf %96, %95 : vector<8x512xf32>
    %98 = arith.mulf %87, %97 : vector<8x512xf32>
    %cst_23 = arith.constant 1.000000e+00 : f32
    %99 = vector.broadcast %cst_23 : f32 to vector<8x512xf32>
    %100 = arith.addf %99, %98 : vector<8x512xf32>
    %cst_24 = arith.constant 2.75573188E-6 : f32
    %101 = vector.broadcast %cst_24 : f32 to vector<8x512xf32>
    %102 = arith.mulf %87, %101 : vector<8x512xf32>
    %cst_25 = arith.constant -1.98412701E-4 : f32
    %103 = vector.broadcast %cst_25 : f32 to vector<8x512xf32>
    %104 = arith.addf %103, %102 : vector<8x512xf32>
    %105 = arith.mulf %87, %104 : vector<8x512xf32>
    %cst_26 = arith.constant 0.00833333377 : f32
    %106 = vector.broadcast %cst_26 : f32 to vector<8x512xf32>
    %107 = arith.addf %106, %105 : vector<8x512xf32>
    %108 = arith.mulf %87, %107 : vector<8x512xf32>
    %cst_27 = arith.constant -0.166666672 : f32
    %109 = vector.broadcast %cst_27 : f32 to vector<8x512xf32>
    %110 = arith.addf %109, %108 : vector<8x512xf32>
    %111 = arith.mulf %87, %110 : vector<8x512xf32>
    %cst_28 = arith.constant 1.000000e+00 : f32
    %112 = vector.broadcast %cst_28 : f32 to vector<8x512xf32>
    %113 = arith.addf %112, %111 : vector<8x512xf32>
    %114 = arith.mulf %86, %113 : vector<8x512xf32>
    %cst_29 = arith.constant 1.000000e+00 : f32
    %115 = vector.broadcast %cst_29 : f32 to vector<8x512xf32>
    %116 = arith.cmpf oeq, %83, %115 : vector<8x512xf32>
    %cst_30 = arith.constant 2.000000e+00 : f32
    %117 = vector.broadcast %cst_30 : f32 to vector<8x512xf32>
    %118 = arith.cmpf oeq, %83, %117 : vector<8x512xf32>
    %cst_31 = arith.constant 3.000000e+00 : f32
    %119 = vector.broadcast %cst_31 : f32 to vector<8x512xf32>
    %120 = arith.cmpf oeq, %83, %119 : vector<8x512xf32>
    %cst_32 = arith.constant 0.000000e+00 : f32
    %121 = vector.broadcast %cst_32 : f32 to vector<8x512xf32>
    %122 = arith.subf %121, %114 : vector<8x512xf32>
    %cst_33 = arith.constant 0.000000e+00 : f32
    %123 = vector.broadcast %cst_33 : f32 to vector<8x512xf32>
    %124 = arith.subf %123, %100 : vector<8x512xf32>
    %125 = arith.select %120, %114, %100 : vector<8x512xi1>, vector<8x512xf32>
    %126 = arith.select %118, %124, %125 : vector<8x512xi1>, vector<8x512xf32>
    %127 = arith.select %116, %122, %126 : vector<8x512xi1>, vector<8x512xf32>
    %cst_34 = arith.constant 0.000000e+00 : f32
    %128 = vector.broadcast %cst_34 : f32 to vector<8x512xf32>
    %129 = arith.subf %128, %114 : vector<8x512xf32>
    %cst_35 = arith.constant 0.000000e+00 : f32
    %130 = vector.broadcast %cst_35 : f32 to vector<8x512xf32>
    %131 = arith.subf %130, %100 : vector<8x512xf32>
    %132 = arith.select %120, %131, %114 : vector<8x512xi1>, vector<8x512xf32>
    %133 = arith.select %118, %129, %132 : vector<8x512xi1>, vector<8x512xf32>
    %134 = arith.select %116, %100, %133 : vector<8x512xi1>, vector<8x512xf32>
    %135 = arith.mulf %80, %127 : vector<8x512xf32>
    %cst_36 = arith.constant 5.000000e-02 : f32
    %136 = vector.broadcast %cst_36 : f32 to vector<8x512xf32>
    %137 = arith.mulf %136, %135 : vector<8x512xf32>
    %138 = arith.mulf %80, %134 : vector<8x512xf32>
    %cst_37 = arith.constant 5.000000e-02 : f32
    %139 = vector.broadcast %cst_37 : f32 to vector<8x512xf32>
    %140 = arith.mulf %139, %138 : vector<8x512xf32>
    %c0_38 = arith.constant 0 : index
    %c0_39 = arith.constant 0 : index
    %141 = vector.load %arg2[%c0_38, %c0_39] : memref<16x512xf32, #tpu.memory_space<vmem>>, vector<16x512xf32>
    %142 = vector.extract_strided_slice %141 {offsets = [0, 0], sizes = [8, 512], strides = [1, 1]} : vector<16x512xf32> to vector<8x512xf32>
    %143 = arith.addf %142, %137 : vector<8x512xf32>
    %c0_40 = arith.constant 0 : index
    %c0_41 = arith.constant 0 : index
    %144 = vector.load %arg3[%c0_40, %c0_41] : memref<16x512xf32, #tpu.memory_space<vmem>>, vector<8x512xf32>
    tpu.vector_store %arg3[%c0_40, %c0_41], %143 {strides = array<i32>} : memref<16x512xf32, #tpu.memory_space<vmem>>, vector<8x512xf32>,
    %145 = vector.extract_strided_slice %141 {offsets = [8, 0], sizes = [8, 512], strides = [1, 1]} : vector<16x512xf32> to vector<8x512xf32>
    %146 = arith.addf %145, %140 : vector<8x512xf32>
    %c8 = arith.constant 8 : index
    %c0_42 = arith.constant 0 : index
    %147 = vector.load %arg3[%c8, %c0_42] : memref<16x512xf32, #tpu.memory_space<vmem>>, vector<8x512xf32>
    tpu.vector_store %arg3[%c8, %c0_42], %146 {strides = array<i32>} : memref<16x512xf32, #tpu.memory_space<vmem>>, vector<8x512xf32>,
    return
  }
  func.func @transform_0(%arg0: i32) -> i32 {
    %c0_i32 = arith.constant 0 : i32
    %c0_i32_0 = arith.constant 0 : i32
    return %c0_i32 : i32
  }
  func.func @transform_1(%arg0: i32) -> (i32, i32) {
    %c0_i32 = arith.constant 0 : i32
    %c0_i32_0 = arith.constant 0 : i32
    return %arg0, %c0_i32 : i32, i32
  }
  func.func @transform_2(%arg0: i32) -> (i32, i32) {
    %c0_i32 = arith.constant 0 : i32
    %c0_i32_0 = arith.constant 0 : i32
    return %arg0, %c0_i32 : i32, i32
  }
}

</mosaic_0001>

<llo_original>
// kernel: tpu_custom_call.1
$region0: #{tpu_custom_call.1}
  #allocation0 [shape = 'u32[]', space=smem, size = 0x4, offset = 0x4, fixed_abs, tag = 'smem constant byte address 0x4 - core index']
  #allocation1 [shape = 'u32[144,128]{1,0:T(1,128)}', space=vmem, size = 0x12000, scoped, tag = 'internal scratch']
  #allocation2 [shape = 's32[1]{0:T(128)S(6)}', space=smem, size = 0x200, scoped, tag = 'scoped memory for tpu_custom_call.1']
  %s0 = inlined_call_operand.<no memory space> [shape: s32[1], index: 0, kind: input, shape index: {}]
  %s1 = inlined_call_operand.hbm [shape: f32[16,512], index: 1, kind: input, shape index: {}]
  %s2 = inlined_call_operand.hbm [shape: f32[16,512], index: 2, kind: output, shape index: {}]
  %s3 = sld [smem:[#allocation0]]
  $region22: #{tpu_custom_call.1} parent=0
    _
  %s5 = ssub.s32 1, %s3
  %s6 = scalar_select 0, %s5, %s3
  %7 = sst [smem:[#allocation2]] %s0
  $region1: #{tpu_custom_call.1} parent=0
    #allocation3 [shape = 'u8[32768]{0}', space=vmem, size = 0x8000, scoped, tag = 'input window, operand 1, single buffered']
    #allocation4 [shape = 's32[1]{0}', space=sflag, size = 0x4, scoped, tag = 'scoped memory for tpu_custom_call.1']
    #allocation5 [shape = 's32[1]{0}', space=sflag, size = 0x4, scoped, tag = 'scoped memory for tpu_custom_call.1']
    #allocation6 [shape = 'u8[32768]{0}', space=vmem, size = 0x8000, scoped, tag = 'output window, operand 0, single buffered']
    %8 = vsyncpa [#allocation4], 0
    %9 = vsyncpa [#allocation5], 0
    // Predicated region
    $region2: #{tpu_custom_call.1} parent=1 // pred_check
      _
    $region3: #{tpu_custom_call.1} parent=1 // pred_check_branch
      %11 = sbr.rel (0) target = $region5
    $region4: #{tpu_custom_call.1} parent=1 // pred_region
      _
    $region5: #{tpu_custom_call.1} parent=1 // pred_fallthru
      _
    // Predicated region
    $region6: #{tpu_custom_call.1} parent=1 // pred_check
      _
    $region7: #{tpu_custom_call.1} parent=1 // pred_check_branch
      %13 = sbr.rel (0) target = $region9
    $region8: #{tpu_custom_call.1} parent=1 // pred_region
      %s15 = ssub.s32 1024, 1024
      %16 = vsyncadd [#allocation4], %s15
      %s17 = sshll.u32 [#allocation3], 4
      %s18 = int_to_ptr.vmem [resolvable:$true] %s17
      %23 = dma.hbm_to_vmem [thread:$0]  %s1, 1024, %s18, [#allocation4], 512, 512, 32
    $region9: #{tpu_custom_call.1} parent=1 // pred_fallthru
      _
    // Predicated region
    $region10: #{tpu_custom_call.1} parent=1 // pred_check
      _
    $region11: #{tpu_custom_call.1} parent=1 // pred_check_branch
      %25 = sbr.rel (0) target = $region13
    $region12: #{tpu_custom_call.1} parent=1 // pred_region
      %26 = dma.done [#allocation4], 1024
    $region13: #{tpu_custom_call.1} parent=1 // pred_fallthru
      _
    %s27 = sld [smem:[#allocation2]]
    %s28 = smul.u32 0, 4096
    %v29 = vlaneseq
    %v30 = vshrl.u32 %v29, 7
    %v31 = vlaneseq
    %v32 = vand.u32 %v31, 127
    %v33 = vadd.s32 %v32, 128
    %v34 = vadd.s32 %v32, 256
    %v35 = vadd.s32 %v32, 384
    %v36 = vmul.u32 %v30, 512
    %v37 = vstv %s28
    %v38 = vadd.s32 %v37, %v36
    %v39 = vadd.s32 %v38, %v32
    %v40 = vadd.s32 %v38, %v33
    %v41 = vadd.s32 %v38, %v34
    %v42 = vadd.s32 %v38, %v35
    %v43 = vmul.u32 %v39, 2654435761
    %v44 = vmul.u32 %v40, 2654435761
    %v45 = vmul.u32 %v41, 2654435761
    %v46 = vmul.u32 %v42, 2654435761
    %s47 = smul.u32 %s27, 2246822519
    %v48 = vstv %s47
    %v49 = vadd.s32 %v43, %v48
    %v50 = vadd.s32 %v44, %v48
    %v51 = vadd.s32 %v45, %v48
    %v52 = vadd.s32 %v46, %v48
    %v53 = vadd.s32 %v49, 1757159915
    %v54 = vadd.s32 %v50, 1757159915
    %v55 = vadd.s32 %v51, 1757159915
    %v56 = vadd.s32 %v52, 1757159915
    %v57 = vshra.s32 %v53, 16
    %v58 = vshra.s32 %v54, 16
    %v59 = vshra.s32 %v55, 16
    %v60 = vshra.s32 %v56, 16
    %v61 = vand.u32 %v57, 65535
    %v62 = vand.u32 %v58, 65535
    %v63 = vand.u32 %v59, 65535
    %v64 = vand.u32 %v60, 65535
    %v65 = vxor.u32 %v53, %v61
    %v66 = vxor.u32 %v54, %v62
    %v67 = vxor.u32 %v55, %v63
    %v68 = vxor.u32 %v56, %v64
    %v69 = vmul.u32 %v65, 2246822507
    %v70 = vmul.u32 %v66, 2246822507
    %v71 = vmul.u32 %v67, 2246822507
    %v72 = vmul.u32 %v68, 2246822507
    %v73 = vshra.s32 %v69, 13
    %v74 = vshra.s32 %v70, 13
    %v75 = vshra.s32 %v71, 13
    %v76 = vshra.s32 %v72, 13
    %v77 = vand.u32 %v73, 524287
    %v78 = vand.u32 %v74, 524287
    %v79 = vand.u32 %v75, 524287
    %v80 = vand.u32 %v76, 524287
    %v81 = vxor.u32 %v69, %v77
    %v82 = vxor.u32 %v70, %v78
    %v83 = vxor.u32 %v71, %v79
    %v84 = vxor.u32 %v72, %v80
    %v85 = vmul.u32 %v81, 3266489909
    %v86 = vmul.u32 %v82, 3266489909
    %v87 = vmul.u32 %v83, 3266489909
    %v88 = vmul.u32 %v84, 3266489909
    %v89 = vshra.s32 %v85, 16
    %v90 = vshra.s32 %v86, 16
    %v91 = vshra.s32 %v87, 16
    %v92 = vshra.s32 %v88, 16
    %v93 = vand.u32 %v89, 65535
    %v94 = vand.u32 %v90, 65535
    %v95 = vand.u32 %v91, 65535
    %v96 = vand.u32 %v92, 65535
    %v97 = vxor.u32 %v85, %v93
    %v98 = vxor.u32 %v86, %v94
    %v99 = vxor.u32 %v87, %v95
    %v100 = vxor.u32 %v88, %v96
    %v101 = vshra.s32 %v97, 8
    %v102 = vshra.s32 %v98, 8
    %v103 = vshra.s32 %v99, 8
    %v104 = vshra.s32 %v100, 8
    %v105 = vand.u32 %v101, 16777215
    %v106 = vand.u32 %v102, 16777215
    %v107 = vand.u32 %v103, 16777215
    %v108 = vand.u32 %v104, 16777215
    %v109 = vcvt.s32.f32 %v105
    %v110 = vcvt.s32.f32 %v106
    %v111 = vcvt.s32.f32 %v107
    %v112 = vcvt.s32.f32 %v108
    %v113 = vadd.f32 %v109, 1.0
    %v114 = vadd.f32 %v110, 1.0
    %v115 = vadd.f32 %v111, 1.0
    %v116 = vadd.f32 %v112, 1.0
    %v117 = vmul.f32 %v113, 5.9604645e-08
    %v118 = vmul.f32 %v114, 5.9604645e-08
    %v119 = vmul.f32 %v115, 5.9604645e-08
    %v120 = vmul.f32 %v116, 5.9604645e-08
    %v121 = vadd.s32 %v49, 48610963
    %v122 = vadd.s32 %v50, 48610963
    %v123 = vadd.s32 %v51, 48610963
    %v124 = vadd.s32 %v52, 48610963
    %v125 = vshra.s32 %v121, 16
    %v126 = vshra.s32 %v122, 16
    %v127 = vshra.s32 %v123, 16
    %v128 = vshra.s32 %v124, 16
    %v129 = vand.u32 %v125, 65535
    %v130 = vand.u32 %v126, 65535
    %v131 = vand.u32 %v127, 65535
    %v132 = vand.u32 %v128, 65535
    %v133 = vxor.u32 %v121, %v129
    %v134 = vxor.u32 %v122, %v130
    %v135 = vxor.u32 %v123, %v131
    %v136 = vxor.u32 %v124, %v132
    %v137 = vmul.u32 %v133, 2246822507
    %v138 = vmul.u32 %v134, 2246822507
    %v139 = vmul.u32 %v135, 2246822507
    %v140 = vmul.u32 %v136, 2246822507
    %v141 = vshra.s32 %v137, 13
    %v142 = vshra.s32 %v138, 13
    %v143 = vshra.s32 %v139, 13
    %v144 = vshra.s32 %v140, 13
    %v145 = vand.u32 %v141, 524287
    %v146 = vand.u32 %v142, 524287
    %v147 = vand.u32 %v143, 524287
    %v148 = vand.u32 %v144, 524287
    %v149 = vxor.u32 %v137, %v145
    %v150 = vxor.u32 %v138, %v146
    %v151 = vxor.u32 %v139, %v147
    %v152 = vxor.u32 %v140, %v148
    %v153 = vmul.u32 %v149, 3266489909
    %v154 = vmul.u32 %v150, 3266489909
    %v155 = vmul.u32 %v151, 3266489909
    %v156 = vmul.u32 %v152, 3266489909
    %v157 = vshra.s32 %v153, 16
    %v158 = vshra.s32 %v154, 16
    %v159 = vshra.s32 %v155, 16
    %v160 = vshra.s32 %v156, 16
    %v161 = vand.u32 %v157, 65535
    %v162 = vand.u32 %v158, 65535
    %v163 = vand.u32 %v159, 65535
    %v164 = vand.u32 %v160, 65535
    %v165 = vxor.u32 %v153, %v161
    %v166 = vxor.u32 %v154, %v162
    %v167 = vxor.u32 %v155, %v163
    %v168 = vxor.u32 %v156, %v164
    %v169 = vshra.s32 %v165, 8
    %v170 = vshra.s32 %v166, 8
    %v171 = vshra.s32 %v167, 8
    %v172 = vshra.s32 %v168, 8
    %v173 = vand.u32 %v169, 16777215
    %v174 = vand.u32 %v170, 16777215
    %v175 = vand.u32 %v171, 16777215
    %v176 = vand.u32 %v172, 16777215
    %v177 = vcvt.s32.f32 %v173
    %v178 = vcvt.s32.f32 %v174
    %v179 = vcvt.s32.f32 %v175
    %v180 = vcvt.s32.f32 %v176
    %v181 = vmul.f32 %v177, 5.9604645e-08
    %v182 = vmul.f32 %v178, 5.9604645e-08
    %v183 = vmul.f32 %v179, 5.9604645e-08
    %v184 = vmul.f32 %v180, 5.9604645e-08
    %v185 = vlog2.pop %v117
    %v186 = vmul.f32 %v185, 0.6931472
    %v187 = vlog2.pop %v118
    %v188 = vmul.f32 %v187, 0.6931472
    %v189 = vlog2.pop %v119
    %v190 = vmul.f32 %v189, 0.6931472
    %v191 = vlog2.pop %v120
    %v192 = vmul.f32 %v191, 0.6931472
    %v193 = vmul.f32 %v186, -2.0
    %v194 = vmul.f32 %v188, -2.0
    %v195 = vmul.f32 %v190, -2.0
    %v196 = vmul.f32 %v192, -2.0
    %v197 = vrsqrt.pop %v193
    %v198 = vmul.f32 %v193, %v197
    %vm199 = vcmp.eq.f32.partialorder %v193, inf
    %v200 = vsel %vm199, %v193, %v198
    %vm201 = vcmp.eq.f32.partialorder %v193, 0.0
    %v202 = vand.u32 %v193, 2147483648
    %v203 = vsel %vm201, %v202, %v200
    %v204 = vrsqrt.pop %v194
    %v205 = vmul.f32 %v194, %v204
    %vm206 = vcmp.eq.f32.partialorder %v194, inf
    %v207 = vsel %vm206, %v194, %v205
    %vm208 = vcmp.eq.f32.partialorder %v194, 0.0
    %v209 = vand.u32 %v194, 2147483648
    %v210 = vsel %vm208, %v209, %v207
    %v211 = vrsqrt.pop %v195
    %v212 = vmul.f32 %v195, %v211
    %vm213 = vcmp.eq.f32.partialorder %v195, inf
    %v214 = vsel %vm213, %v195, %v212
    %vm215 = vcmp.eq.f32.partialorder %v195, 0.0
    %v216 = vand.u32 %v195, 2147483648
    %v217 = vsel %vm215, %v216, %v214
    %v218 = vrsqrt.pop %v196
    %v219 = vmul.f32 %v196, %v218
    %vm220 = vcmp.eq.f32.partialorder %v196, inf
    %v221 = vsel %vm220, %v196, %v219
    %vm222 = vcmp.eq.f32.partialorder %v196, 0.0
    %v223 = vand.u32 %v196, 2147483648
    %v224 = vsel %vm222, %v223, %v221
    %v225 = vmul.f32 %v181, 4.0
    %v226 = vmul.f32 %v182, 4.0
    %v227 = vmul.f32 %v183, 4.0
    %v228 = vmul.f32 %v184, 4.0
    %v229 = vfloor.f32 %v225
    %v230 = vfloor.f32 %v226
    %v231 = vfloor.f32 %v227
    %v232 = vfloor.f32 %v228
    %v233 = vsub.f32 %v225, %v229
    %v234 = vsub.f32 %v226, %v230
    %v235 = vsub.f32 %v227, %v231
    %v236 = vsub.f32 %v228, %v232
    %v237 = vmul.f32 %v233, 1.5707964
    %v238 = vmul.f32 %v234, 1.5707964
    %v239 = vmul.f32 %v235, 1.5707964
    %v240 = vmul.f32 %v236, 1.5707964
    %v241 = vmul.f32 %v237, %v237
    %v242 = vmul.f32 %v238, %v238
    %v243 = vmul.f32 %v239, %v239
    %v244 = vmul.f32 %v240, %v240
    %v245 = vmul.f32 %v241, 2.4801588e-05
    %v246 = vmul.f32 %v242, 2.4801588e-05
    %v247 = vmul.f32 %v243, 2.4801588e-05
    %v248 = vmul.f32 %v244, 2.4801588e-05
    %v249 = vadd.f32 %v245, -0.0013888889
    %v250 = vadd.f32 %v246, -0.0013888889
    %v251 = vadd.f32 %v247, -0.0013888889
    %v252 = vadd.f32 %v248, -0.0013888889
    %v253 = vmul.f32 %v241, %v249
    %v254 = vmul.f32 %v242, %v250
    %v255 = vmul.f32 %v243, %v251
    %v256 = vmul.f32 %v244, %v252
    %v257 = vadd.f32 %v253, 0.041666668
    %v258 = vadd.f32 %v254, 0.041666668
    %v259 = vadd.f32 %v255, 0.041666668
    %v260 = vadd.f32 %v256, 0.041666668
    %v261 = vmul.f32 %v241, %v257
    %v262 = vmul.f32 %v242, %v258
    %v263 = vmul.f32 %v243, %v259
    %v264 = vmul.f32 %v244, %v260
    %v265 = vadd.f32 %v261, -0.5
    %v266 = vadd.f32 %v262, -0.5
    %v267 = vadd.f32 %v263, -0.5
    %v268 = vadd.f32 %v264, -0.5
    %v269 = vmul.f32 %v241, %v265
    %v270 = vmul.f32 %v242, %v266
    %v271 = vmul.f32 %v243, %v267
    %v272 = vmul.f32 %v244, %v268
    %v273 = vadd.f32 %v269, 1.0
    %v274 = vadd.f32 %v270, 1.0
    %v275 = vadd.f32 %v271, 1.0
    %v276 = vadd.f32 %v272, 1.0
    %v277 = vmul.f32 %v241, 2.7557319e-06
    %v278 = vmul.f32 %v242, 2.7557319e-06
    %v279 = vmul.f32 %v243, 2.7557319e-06
    %v280 = vmul.f32 %v244, 2.7557319e-06
    %v281 = vadd.f32 %v277, -0.0001984127
    %v282 = vadd.f32 %v278, -0.0001984127
    %v283 = vadd.f32 %v279, -0.0001984127
    %v284 = vadd.f32 %v280, -0.0001984127
    %v285 = vmul.f32 %v241, %v281
    %v286 = vmul.f32 %v242, %v282
    %v287 = vmul.f32 %v243, %v283
    %v288 = vmul.f32 %v244, %v284
    %v289 = vadd.f32 %v285, 0.008333334
    %v290 = vadd.f32 %v286, 0.008333334
    %v291 = vadd.f32 %v287, 0.008333334
    %v292 = vadd.f32 %v288, 0.008333334
    %v293 = vmul.f32 %v241, %v289
    %v294 = vmul.f32 %v242, %v290
    %v295 = vmul.f32 %v243, %v291
    %v296 = vmul.f32 %v244, %v292
    %v297 = vadd.f32 %v293, -0.16666667
    %v298 = vadd.f32 %v294, -0.16666667
    %v299 = vadd.f32 %v295, -0.16666667
    %v300 = vadd.f32 %v296, -0.16666667
    %v301 = vmul.f32 %v241, %v297
    %v302 = vmul.f32 %v242, %v298
    %v303 = vmul.f32 %v243, %v299
    %v304 = vmul.f32 %v244, %v300
    %v305 = vadd.f32 %v301, 1.0
    %v306 = vadd.f32 %v302, 1.0
    %v307 = vadd.f32 %v303, 1.0
    %v308 = vadd.f32 %v304, 1.0
    %v309 = vmul.f32 %v237, %v305
    %v310 = vmul.f32 %v238, %v306
    %v311 = vmul.f32 %v239, %v307
    %v312 = vmul.f32 %v240, %v308
    %vm313 = vcmp.eq.f32.partialorder %v229, 1.0
    %vm314 = vcmp.eq.f32.partialorder %v230, 1.0
    %vm315 = vcmp.eq.f32.partialorder %v231, 1.0
    %vm316 = vcmp.eq.f32.partialorder %v232, 1.0
    %vm317 = vcmp.eq.f32.partialorder %v229, 2.0
    %vm318 = vcmp.eq.f32.partialorder %v230, 2.0
    %vm319 = vcmp.eq.f32.partialorder %v231, 2.0
    %vm320 = vcmp.eq.f32.partialorder %v232, 2.0
    %vm321 = vcmp.eq.f32.partialorder %v229, 3.0
    %vm322 = vcmp.eq.f32.partialorder %v230, 3.0
    %vm323 = vcmp.eq.f32.partialorder %v231, 3.0
    %vm324 = vcmp.eq.f32.partialorder %v232, 3.0
    %v325 = vsub.f32 0.0, %v309
    %v326 = vsub.f32 0.0, %v310
    %v327 = vsub.f32 0.0, %v311
    %v328 = vsub.f32 0.0, %v312
    %v329 = vsub.f32 0.0, %v273
    %v330 = vsub.f32 0.0, %v274
    %v331 = vsub.f32 0.0, %v275
    %v332 = vsub.f32 0.0, %v276
    %v333 = vsel %vm321, %v309, %v273
    %v334 = vsel %vm322, %v310, %v274
    %v335 = vsel %vm323, %v311, %v275
    %v336 = vsel %vm324, %v312, %v276
    %v337 = vsel %vm317, %v329, %v333
    %v338 = vsel %vm318, %v330, %v334
    %v339 = vsel %vm319, %v331, %v335
    %v340 = vsel %vm320, %v332, %v336
    %v341 = vsel %vm313, %v325, %v337
    %v342 = vsel %vm314, %v326, %v338
    %v343 = vsel %vm315, %v327, %v339
    %v344 = vsel %vm316, %v328, %v340
    %v345 = vsel %vm321, %v329, %v309
    %v346 = vsel %vm322, %v330, %v310
    %v347 = vsel %vm323, %v331, %v311
    %v348 = vsel %vm324, %v332, %v312
    %v349 = vsel %vm317, %v325, %v345
    %v350 = vsel %vm318, %v326, %v346
    %v351 = vsel %vm319, %v327, %v347
    %v352 = vsel %vm320, %v328, %v348
    %v353 = vsel %vm313, %v273, %v349
    %v354 = vsel %vm314, %v274, %v350
    %v355 = vsel %vm315, %v275, %v351
    %v356 = vsel %vm316, %v276, %v352
    %v357 = vmul.f32 %v203, %v341
    %v358 = vmul.f32 %v210, %v342
    %v359 = vmul.f32 %v217, %v343
    %v360 = vmul.f32 %v224, %v344
    %v361 = vmul.f32 %v357, 0.05
    %v362 = vmul.f32 %v358, 0.05
    %v363 = vmul.f32 %v359, 0.05
    %v364 = vmul.f32 %v360, 0.05
    %v365 = vmul.f32 %v203, %v353
    %v366 = vmul.f32 %v210, %v354
    %v367 = vmul.f32 %v217, %v355
    %v368 = vmul.f32 %v224, %v356
    %v369 = vmul.f32 %v365, 0.05
    %v370 = vmul.f32 %v366, 0.05
    %v371 = vmul.f32 %v367, 0.05
    %v372 = vmul.f32 %v368, 0.05
    %v373 = vld [vmem:[#allocation3] sm:$0xff]
    %v374 = vld [vmem:[#allocation3 + $0x8] sm:$0xff]
    %v375 = vld [vmem:[#allocation3 + $0x10] sm:$0xff]
    %v376 = vld [vmem:[#allocation3 + $0x18] sm:$0xff]
    %v377 = vld [vmem:[#allocation3 + $0x20] sm:$0xff]
    %v378 = vld [vmem:[#allocation3 + $0x28] sm:$0xff]
    %v379 = vld [vmem:[#allocation3 + $0x30] sm:$0xff]
    %v380 = vld [vmem:[#allocation3 + $0x38] sm:$0xff]
    %v381 = vadd.f32 %v373, %v361
    %v382 = vadd.f32 %v374, %v362
    %v383 = vadd.f32 %v375, %v363
    %v384 = vadd.f32 %v376, %v364
    %385 = vst [vmem:[#allocation6] sm:$0xff] %v381
    %386 = vst [vmem:[#allocation6 + $0x8] sm:$0xff] %v382
    %387 = vst [vmem:[#allocation6 + $0x10] sm:$0xff] %v383
    %388 = vst [vmem:[#allocation6 + $0x18] sm:$0xff] %v384
    %v389 = vadd.f32 %v377, %v369
    %v390 = vadd.f32 %v378, %v370
    %v391 = vadd.f32 %v379, %v371
    %v392 = vadd.f32 %v380, %v372
    %393 = vst [vmem:[#allocation6 + $0x20] sm:$0xff] %v389
    %394 = vst [vmem:[#allocation6 + $0x28] sm:$0xff] %v390
    %395 = vst [vmem:[#allocation6 + $0x30] sm:$0xff] %v391
    %396 = vst [vmem:[#allocation6 + $0x38] sm:$0xff] %v392
    // Predicated region
    $region14: #{tpu_custom_call.1} parent=1 // pred_check
      _
    $region15: #{tpu_custom_call.1} parent=1 // pred_check_branch
      %398 = sbr.rel (0) target = $region17
    $region16: #{tpu_custom_call.1} parent=1 // pred_region
      %s400 = ssub.s32 1024, 1024
      %401 = vsyncadd [#allocation5], %s400
      %s402 = sshll.u32 [#allocation6], 4
      %s403 = int_to_ptr.vmem [resolvable:$true] %s402
      %408 = dma.vmem_to_hbm [thread:$0]  %s403, 1024, %s2, [#allocation5], 512, 512, 32
    $region17: #{tpu_custom_call.1} parent=1 // pred_fallthru
      _
    // Predicated region
    $region18: #{tpu_custom_call.1} parent=1 // pred_check
      _
    $region19: #{tpu_custom_call.1} parent=1 // pred_check_branch
      %410 = sbr.rel (0) target = $region21
    $region20: #{tpu_custom_call.1} parent=1 // pred_region
      %411 = dma.done [#allocation5], 1024
    $region21: #{tpu_custom_call.1} parent=1 // pred_fallthru
      _
    %412 = vsyncpa [#allocation4], 1
    %413 = vsyncpa [#allocation5], 1

</llo_original>
